<compile_context>
chip_gen: v7x
topology: tpu7x:2x2x1
jax: 0.10.0
libtpu: 0.0.40
codegen_flags: <defaults>
</compile_context>

<pallas_src>
import functools

import jax
import jax.numpy as jnp
from jax.experimental import pallas as pl
from jax.experimental.pallas import tpu as pltpu


def _round_up(x, m):
    return -(-x // m) * m


def gat_kernel(x_ref, w_ref, adj_ref, out_ref, *, m_real):
    # h = x @ W on the MXU: bf16 operands, f32 accumulation.
    h = jnp.dot(x_ref[...], w_ref[...], preferred_element_type=jnp.float32)  # (bn, Mp)

    # Reduced masked softmax (see header). adj is already a 0/1 int8 mask, so
    # no compare is needed; just widen to f32.
    mask_f = adj_ref[...].astype(jnp.float32)                                # (bn, Mp)
    cnt = jnp.sum(mask_f, axis=1, keepdims=True)                             # (bn, 1)
    row_empty = cnt == 0.0
    denom = jnp.where(row_empty, jnp.float32(m_real), cnt)                   # (bn, 1)
    # Exact divide: only bn scalars per tile, bit-closer to torch's softmax.
    inv = 1.0 / denom                                                        # (bn, 1)

    # TODO(synk): F.dropout on the attention is skipped — eval-mode semantics
    # (identity); training-mode dropout would need pltpu.prng_seed/prng_random_bits.

    # h' = att * h, fused: fully-masked rows use uniform 1/M attention.
    hp = jnp.where(row_empty, h, mask_f * h) * inv

    # ELU(alpha=1). exp overflow on the discarded positive branch is inf (not
    # NaN), so the select is safe in the forward pass.
    out_ref[...] = jnp.where(hp > 0.0, hp, jnp.exp(hp) - 1.0).astype(out_ref.dtype)


@functools.partial(jax.jit, static_argnames=("block_n", "out_dtype"))
def gat_forward(x, W, a, adj, *, block_n=512, out_dtype=jnp.float32):
    # `a` is mathematically unused in this module's forward output (row-constant
    # e makes the softmax independent of it) — kept in the signature for parity.
    del a

    N, Fin = x.shape
    M = W.shape[1]

    # Cast FIRST so any wrapper-side padding copies move bf16 / int8, not f32.
    x_bf = x.astype(jnp.bfloat16)
    w_bf = W.astype(jnp.bfloat16)
    adj_i8 = (adj > 0).astype(jnp.int8)

    # Pad the feature dim to a multiple of 128 -> lane-dense (unmasked) stores.
    Mp = _round_up(M, 128)
    if Mp != M:
        w_bf = jnp.pad(w_bf, ((0, 0), (0, Mp - M)))
        adj_i8 = jnp.pad(adj_i8, ((0, 0), (0, Mp - M)))

    # Row tile: multiple of 32 so f32 / bf16 / int8 sublane tilings all line up,
    # large enough to amortize the ~0.35 us per-grid-step overhead, and capped
    # so the grid has >= 2 parallel steps when possible (v7x has 2 TensorCores).
    bn = min(block_n, _round_up(N, 32))
    if N > 32:
        bn = min(bn, _round_up(-(-N // 2), 32))
    bn = max(32, _round_up(bn, 32))
    Np = _round_up(N, bn)
    if Np != N:
        x_bf = jnp.pad(x_bf, ((0, Np - N), (0, 0)))
        adj_i8 = jnp.pad(adj_i8, ((0, Np - N), (0, 0)))

    grid = (Np // bn,)
    out_bytes = jnp.dtype(out_dtype).itemsize

    # VMEM budget derived from the actual tile sizes (stays well under v7x's
    # 64 MiB per-TC VMEM for the default bn=512).
    vmem_bytes = (
        2 * bn * Fin * 2            # x tile, double-buffered bf16
        + 2 * bn * Mp * 1           # adj tile, double-buffered int8
        + 2 * bn * Mp * out_bytes   # output tile, double-buffered
        + 2 * Fin * Mp * 2          # W (constant index_map, still 2 buffers)
        + 4 * bn * Mp * 4           # f32 in-kernel temporaries (h, hp, exp, ...)
    )
    vmem_limit = int(min(max(vmem_bytes * 3 // 2, 8 << 20), 56 << 20))

    kernel = functools.partial(gat_kernel, m_real=M)

    bytes_accessed = (x_bf.size * 2) + (w_bf.size * 2) + adj_i8.size + Np * Mp * out_bytes

    out = pl.pallas_call(
        kernel,
        out_shape=jax.ShapeDtypeStruct((Np, Mp), out_dtype),
        grid=grid,
        in_specs=[
            pl.BlockSpec((bn, Fin), lambda i: (i, 0)),   # row-block of input (bf16)
            pl.BlockSpec((Fin, Mp), lambda i: (0, 0)),   # full W, resident (bf16)
            pl.BlockSpec((bn, Mp), lambda i: (i, 0)),    # row-block of adj (int8)
        ],
        out_specs=pl.BlockSpec((bn, Mp), lambda i: (i, 0)),
        compiler_params=pltpu.CompilerParams(
            dimension_semantics=("parallel",),
            vmem_limit_bytes=vmem_limit,
        ),
        cost_estimate=pl.CostEstimate(
            flops=2 * Np * Fin * Mp,
            transcendentals=Np * Mp,            # the ELU exp
            bytes_accessed=bytes_accessed,
        ),
    )(x_bf, w_bf, adj_i8)

    if Np != N or Mp != M:
        out = out[:N, :M]
    return out


if __name__ == "__main__":
    key = jax.random.PRNGKey(0)
    # Small shapes; Fout=96 and N=48 deliberately exercise lane/row padding and
    # the >=2-grid-step tiling path.
    N, Fin, Fout = 48, 32, 96
    k_w, k_a, k_x, k_adj = jax.random.split(key, 4)

    # Deterministic xavier_uniform-style init (gain=1.414), same shapes as module.
    gain = 1.414
    w_bound = gain * (6.0 / (Fin + Fout)) ** 0.5
    W = jax.random.uniform(k_w, (Fin, Fout), jnp.float32, -w_bound, w_bound)
    a_bound = gain * (6.0 / (2 * Fout + 1)) ** 0.5
    a = jax.random.uniform(k_a, (2 * Fout, 1), jnp.float32, -a_bound, a_bound)

    x = jax.random.normal(k_x, (N, Fin), dtype=jnp.float32)
    adj = (jax.random.uniform(k_adj, (N, Fout)) > 0.5).astype(jnp.float32)

    out = gat_forward(x, W, a, adj)
    jax.block_until_ready(out)
    assert out.shape == (N, Fout) and out.dtype == jnp.float32
    assert bool(jnp.all(jnp.isfinite(out)))
    print("KERNEL_OK")
</pallas_src>

<mosaic_0001>
module attributes {stable_mosaic.version = 11 : i64} {
  func.func @gat_kernel(%arg0: i32, %arg1: memref<32x32xbf16, #tpu.memory_space<vmem>>, %arg2: memref<32x128xbf16, #tpu.memory_space<vmem>>, %arg3: memref<32x128xi8, #tpu.memory_space<vmem>>, %arg4: memref<32x128xf32, #tpu.memory_space<vmem>>) attributes {dimension_semantics = [#tpu.dimension_semantics<parallel>], iteration_bounds = array<i64: 2>, scalar_prefetch = 0 : i64, scratch_operands = 0 : i64, tpu.core_type = #tpu.core_type<tc>, window_params = [{transform_indices = @transform_0, window_bounds = array<i64: 32, 32>}, {pipeline_mode = #tpu.pipeline_mode<synchronous>, transform_indices = @transform_1, window_bounds = array<i64: 32, 128>}, {transform_indices = @transform_2, window_bounds = array<i64: 32, 128>}, {transform_indices = @transform_3, window_bounds = array<i64: 32, 128>}]} {
    %c0 = arith.constant 0 : index
    %c0_0 = arith.constant 0 : index
    %0 = vector.load %arg1[%c0, %c0_0] : memref<32x32xbf16, #tpu.memory_space<vmem>>, vector<32x32xbf16>
    %c0_1 = arith.constant 0 : index
    %c0_2 = arith.constant 0 : index
    %1 = vector.load %arg2[%c0_1, %c0_2] : memref<32x128xbf16, #tpu.memory_space<vmem>>, vector<32x128xbf16>
    %cst = arith.constant dense<0.000000e+00> : vector<32x128xf32>
    %2 = tpu.matmul %0, %1, %cst {dimension_numbers = #tpu.dot_dimension_numbers<[1], [0], [0], [1], [0, 0, 1, 1], [], []>} : vector<32x32xbf16>, vector<32x128xbf16>, vector<32x128xf32> -> vector<32x128xf32>
    %c0_3 = arith.constant 0 : index
    %c0_4 = arith.constant 0 : index
    %3 = vector.load %arg3[%c0_3, %c0_4] : memref<32x128xi8, #tpu.memory_space<vmem>>, vector<32x128xi8>
    %4 = arith.sitofp %3 : vector<32x128xi8> to vector<32x128xf32>
    %cst_5 = arith.constant dense<0.000000e+00> : vector<32xf32>
    %5 = vector.multi_reduction <add>, %4, %cst_5 [1] : vector<32x128xf32> to vector<32xf32>
    %6 = vector.shape_cast %5 : vector<32xf32> to vector<32x1xf32>
    %cst_6 = arith.constant 0.000000e+00 : f32
    %7 = vector.broadcast %cst_6 : f32 to vector<32x1xf32>
    %8 = arith.cmpf oeq, %6, %7 : vector<32x1xf32>
    %cst_7 = arith.constant 9.600000e+01 : f32
    %9 = vector.broadcast %cst_7 : f32 to vector<32x1xf32>
    %10 = arith.select %8, %9, %6 : vector<32x1xi1>, vector<32x1xf32>
    %cst_8 = arith.constant 1.000000e+00 : f32
    %11 = vector.broadcast %cst_8 : f32 to vector<32x1xf32>
    %12 = arith.divf %11, %10 : vector<32x1xf32>
    %13 = arith.mulf %4, %2 : vector<32x128xf32>
    %14 = vector.shape_cast %8 : vector<32x1xi1> to vector<32x1xi1>
    %15 = vector.broadcast %14 : vector<32x1xi1> to vector<32x128xi1>
    %16 = arith.select %15, %2, %13 : vector<32x128xi1>, vector<32x128xf32>
    %17 = vector.broadcast %12 : vector<32x1xf32> to vector<32x128xf32>
    %18 = arith.mulf %16, %17 : vector<32x128xf32>
    %cst_9 = arith.constant 0.000000e+00 : f32
    %19 = vector.broadcast %cst_9 : f32 to vector<32x128xf32>
    %20 = arith.cmpf ogt, %18, %19 : vector<32x128xf32>
    %21 = math.exp %18 : vector<32x128xf32>
    %cst_10 = arith.constant 1.000000e+00 : f32
    %22 = vector.broadcast %cst_10 : f32 to vector<32x128xf32>
    %23 = arith.subf %21, %22 : vector<32x128xf32>
    %24 = arith.select %20, %18, %23 : vector<32x128xi1>, vector<32x128xf32>
    %c0_11 = arith.constant 0 : index
    %c0_12 = arith.constant 0 : index
    %25 = vector.load %arg4[%c0_11, %c0_12] : memref<32x128xf32, #tpu.memory_space<vmem>>, vector<32x128xf32>
    tpu.vector_store %arg4[%c0_11, %c0_12], %24 {strides = array<i32>} : memref<32x128xf32, #tpu.memory_space<vmem>>, vector<32x128xf32>,
    return
  }
  func.func @transform_0(%arg0: i32) -> (i32, i32) {
    %c0_i32 = arith.constant 0 : i32
    %c0_i32_0 = arith.constant 0 : i32
    return %arg0, %c0_i32 : i32, i32
  }
  func.func @transform_1(%arg0: i32) -> (i32, i32) {
    %c0_i32 = arith.constant 0 : i32
    %c0_i32_0 = arith.constant 0 : i32
    %c0_i32_1 = arith.constant 0 : i32
    return %c0_i32, %c0_i32_0 : i32, i32
  }
  func.func @transform_2(%arg0: i32) -> (i32, i32) {
    %c0_i32 = arith.constant 0 : i32
    %c0_i32_0 = arith.constant 0 : i32
    return %arg0, %c0_i32 : i32, i32
  }
  func.func @transform_3(%arg0: i32) -> (i32, i32) {
    %c0_i32 = arith.constant 0 : i32
    %c0_i32_0 = arith.constant 0 : i32
    return %arg0, %c0_i32 : i32, i32
  }
}

</mosaic_0001>

<llo_original>
// kernel: gat_forward.1
$region0: #{gat_forward.1}
  #allocation0 [shape = 'u32[]', space=smem, size = 0x4, offset = 0x4, fixed_abs, tag = 'smem constant byte address 0x4 - core index']
  #allocation1 [shape = 'u32[144,128]{1,0:T(1,128)}', space=vmem, size = 0x12000, scoped, tag = 'internal scratch']
  %s0 = inlined_call_operand.vmem [shape: bf16[64,32], index: 0, kind: input, shape index: {}]
  %s1 = inlined_call_operand.vmem [shape: bf16[32,128], index: 1, kind: input, shape index: {}]
  %s2 = inlined_call_operand.vmem [shape: s8[64,128], index: 2, kind: input, shape index: {}]
  %s3 = inlined_call_operand.vmem [shape: f32[64,128], index: 3, kind: output, shape index: {}]
  %s4 = sld [smem:[#allocation0]]
  $region45: #{gat_forward.1} parent=0
    _
  %s6 = ssub.s32 1, %s4
  %s7 = scalar_select 0, %s6, %s4
  loop: start=0, step=1, limit=4
  $region2: #{gat_forward.1} parent=0 // loop_pre_header
    _
  $region3: #{gat_forward.1} parent=0 // loop_header
    %s9 = sphi 0, %s13
    %p10 = scmp.ge.s32.totalorder %s9, 4
    %s19 = sphi 0, %s21
    %s22 = sphi 0, %s19
    %s23 = sphi 0, %s22
    %s39 = sphi 0, %s23
    %s43 = sphi 0, %s43
    %s45 = sphi 0, %s43
    %s46 = sphi 0, %s45
    %s60 = sphi 0, %s46
    %s66 = sphi 0, %s68
    %s69 = sphi 0, %s66
    %s70 = sphi 0, %s69
    %s86 = sphi 0, %s70
    %s92 = sphi 0, %s94
    %s95 = sphi 0, %s92
    %s96 = sphi 0, %s95
    %s112 = sphi 0, %s96
  $region4: #{gat_forward.1} parent=0 // loop_header_branch
    %12 = sbr.rel (%p10) target = $region8
  $region5: #{gat_forward.1} parent=0 // loop_body
    %s14 = ssub.s32 %s9, 1
    %s15 = ssub.s32 %s9, 2
    %s16 = sadd.s32 %s9, 1
    %s17 = ssub.s32 %s9, %s16
    %p18 = scmp.eq.s32.totalorder %s17, 0
    %s20 = sadd.s32 %s19, 1
    %s21 = scalar_select %p18, %s19, %s20
    %p24 = pneg %p18
    %p25 = scmp.eq.s32.totalorder %s9, 1
    %p26 = por %p24, %p25
    %p27 = scmp.ne.s32.totalorder %s19, %s22
    %p28 = scmp.eq.s32.totalorder %s9, 0
    %p29 = por %p27, %p28
    %p30 = scmp.ne.s32.totalorder %s19, %s22
    %p31 = scmp.eq.s32.totalorder %s14, 1
    %p32 = por %p30, %p31
    %p33 = scmp.ne.s32.totalorder %s22, %s23
    %p34 = scmp.eq.s32.totalorder %s14, 0
    %p35 = por %p33, %p34
    %p36 = scmp.ne.s32.totalorder %s22, %s23
    %p37 = scmp.eq.s32.totalorder %s15, 1
    %p38 = por %p36, %p37
    %p40 = scmp.ne.s32.totalorder %s23, %s39
    %p41 = scmp.eq.s32.totalorder %s15, 0
    %p42 = por %p40, %p41
    %s44 = sadd.s32 %s43, 1
    %p47 = scmp.eq.s32.totalorder %s9, 1
    %p48 = scmp.ne.s32.totalorder %s43, %s45
    %p49 = scmp.eq.s32.totalorder %s9, 0
    %p50 = por %p48, %p49
    %p51 = scmp.ne.s32.totalorder %s43, %s45
    %p52 = scmp.eq.s32.totalorder %s14, 1
    %p53 = por %p51, %p52
    %p54 = scmp.ne.s32.totalorder %s45, %s46
    %p55 = scmp.eq.s32.totalorder %s14, 0
    %p56 = por %p54, %p55
    %p57 = scmp.ne.s32.totalorder %s45, %s46
    %p58 = scmp.eq.s32.totalorder %s15, 1
    %p59 = por %p57, %p58
    %p61 = scmp.ne.s32.totalorder %s46, %s60
    %p62 = scmp.eq.s32.totalorder %s15, 0
    %p63 = por %p61, %p62
    %s64 = ssub.s32 %s9, %s16
    %p65 = scmp.eq.s32.totalorder %s64, 0
    %s67 = sadd.s32 %s66, 1
    %s68 = scalar_select %p65, %s66, %s67
    %p71 = pneg %p65
    %p72 = scmp.eq.s32.totalorder %s9, 1
    %p73 = por %p71, %p72
    %p74 = scmp.ne.s32.totalorder %s66, %s69
    %p75 = scmp.eq.s32.totalorder %s9, 0
    %p76 = por %p74, %p75
    %p77 = scmp.ne.s32.totalorder %s66, %s69
    %p78 = scmp.eq.s32.totalorder %s14, 1
    %p79 = por %p77, %p78
    %p80 = scmp.ne.s32.totalorder %s69, %s70
    %p81 = scmp.eq.s32.totalorder %s14, 0
    %p82 = por %p80, %p81
    %p83 = scmp.ne.s32.totalorder %s69, %s70
    %p84 = scmp.eq.s32.totalorder %s15, 1
    %p85 = por %p83, %p84
    %p87 = scmp.ne.s32.totalorder %s70, %s86
    %p88 = scmp.eq.s32.totalorder %s15, 0
    %p89 = por %p87, %p88
    %s90 = ssub.s32 %s9, %s16
    %p91 = scmp.eq.s32.totalorder %s90, 0
    %s93 = sadd.s32 %s92, 1
    %s94 = scalar_select %p91, %s92, %s93
    %p97 = pneg %p91
    %p98 = scmp.eq.s32.totalorder %s9, 1
    %p99 = por %p97, %p98
    %p100 = scmp.ne.s32.totalorder %s92, %s95
    %p101 = scmp.eq.s32.totalorder %s9, 0
    %p102 = por %p100, %p101
    %p103 = scmp.ne.s32.totalorder %s92, %s95
    %p104 = scmp.eq.s32.totalorder %s14, 1
    %p105 = por %p103, %p104
    %p106 = scmp.ne.s32.totalorder %s95, %s96
    %p107 = scmp.eq.s32.totalorder %s14, 0
    %p108 = por %p106, %p107
    %p109 = scmp.ne.s32.totalorder %s95, %s96
    %p110 = scmp.eq.s32.totalorder %s15, 1
    %p111 = por %p109, %p110
    %p113 = scmp.ne.s32.totalorder %s96, %s112
    %p114 = scmp.eq.s32.totalorder %s15, 0
    %p115 = por %p113, %p114
    %p116 = scmp.le.s32.totalorder 1, %s9
    %p117 = scmp.lt.s32.totalorder %s9, 3
    %p118 = pnand %p116, %p117
    %p119 = pneg %p118
    // Predicated region
    $region9: #{gat_forward.1} parent=5 // pred_check
      _
    $region10: #{gat_forward.1} parent=5 // pred_check_branch
      %121 = sbr.rel (%p118) target = $region12
    $region11: #{gat_forward.1} parent=5 // pred_region
      %s122 = ssub.s32 %s9, 1
      // Predicated region
      $region13: #{gat_forward.1} parent=11 // pred_check
        %p123 = pneg %p56
      $region14: #{gat_forward.1} parent=11 // pred_check_branch
        %125 = sbr.rel (%p123) target = $region16
      $region15: #{gat_forward.1} parent=11 // pred_region
        _
      $region16: #{gat_forward.1} parent=11 // pred_fallthru
        _
    $region12: #{gat_forward.1} parent=5 // pred_fallthru
      _
    %p126 = scmp.lt.s32.totalorder %s9, 2
    // Predicated region
    $region17: #{gat_forward.1} parent=5 // pred_check
      %p127 = pneg %p126
    $region18: #{gat_forward.1} parent=5 // pred_check_branch
      %129 = sbr.rel (%p127) target = $region20
    $region19: #{gat_forward.1} parent=5 // pred_region
      // Predicated region
      $region21: #{gat_forward.1} parent=19 // pred_check
        %p130 = pneg %p29
      $region22: #{gat_forward.1} parent=19 // pred_check_branch
        %132 = sbr.rel (%p130) target = $region24
      $region23: #{gat_forward.1} parent=19 // pred_region
        %s133 = smul.u32 4, %s9
        %p134 = scmp.lt.s32.totalorder %s133, 7
        %s135 = scalar_select %p134, %s133, 7
        %s136 = smul.addr %s135, 4
        %s137 = scalar_lea.vmem %s0, %s136
        %s138 = smul.u32 4, %s9
      $region24: #{gat_forward.1} parent=19 // pred_fallthru
        _
      // Predicated region
      $region25: #{gat_forward.1} parent=19 // pred_check
        %p139 = pneg %p76
      $region26: #{gat_forward.1} parent=19 // pred_check_branch
        %141 = sbr.rel (%p139) target = $region28
      $region27: #{gat_forward.1} parent=19 // pred_region
        %p142 = scmp.lt.s32.totalorder %s9, 1
        %s143 = scalar_select %p142, %s9, 1
        %s144 = smul.addr %s143, 8
        %s145 = scalar_lea.vmem %s2, %s144
      $region28: #{gat_forward.1} parent=19 // pred_fallthru
        _
    $region20: #{gat_forward.1} parent=5 // pred_fallthru
      _
    %p146 = scmp.le.s32.totalorder 1, %s9
    %p147 = scmp.lt.s32.totalorder %s9, 3
    %p148 = pnand %p146, %p147
    %p149 = pneg %p148
    // Predicated region
    $region29: #{gat_forward.1} parent=5 // pred_check
      _
    $region30: #{gat_forward.1} parent=5 // pred_check_branch
      %151 = sbr.rel (%p148) target = $region32
    $region31: #{gat_forward.1} parent=5 // pred_region
      %s152 = ssub.s32 %s9, 1
      %s153 = smul.u32 4, %s14
      %p154 = scmp.lt.s32.totalorder %s153, 7
      %s155 = scalar_select %p154, %s153, 7
      %s156 = smul.addr %s155, 4
      %s157 = scalar_lea.vmem %s0, %s156
      %p158 = pneg %p35
      %p159 = pneg %p32
      %p160 = pneg %p56
      %p161 = pneg %p53
      %p162 = scmp.lt.s32.totalorder %s14, 1
      %s163 = scalar_select %p162, %s14, 1
      %s164 = smul.addr %s163, 8
      %s165 = scalar_lea.vmem %s2, %s164
      %p166 = pneg %p82
      %p167 = pneg %p79
      %p168 = pneg %p108
      %p169 = pneg %p105
      %s170 = smul.u32 4, %s14
      %p171 = scmp.lt.s32.totalorder %s170, 7
      %s172 = scalar_select %p171, %s170, 7
      %s173 = smul.addr %s172, 8
      %s174 = scalar_lea.vmem %s3, %s173
      %s175 = smul.u32 4, %s14
      %p176 = scmp.lt.s32.totalorder %s175, 7
      %s177 = scalar_select %p176, %s175, 7
      %s178 = smul.addr %s177, 4
      %s179 = scalar_lea.vmem %s0, %s178
      %s180 = smul.u32 4, %s14
      %p181 = scmp.lt.s32.totalorder %s14, 1
      %s182 = scalar_select %p181, %s14, 1
      %s183 = smul.addr %s182, 8
      %s184 = scalar_lea.vmem %s2, %s183
      %s185 = smul.u32 4, %s14
      %p186 = scmp.lt.s32.totalorder %s185, 7
      %s187 = scalar_select %p186, %s185, 7
      %s188 = smul.addr %s187, 8
      %s189 = scalar_lea.vmem %s3, %s188
      %s190 = smul.u32 4, %s14
      %v192 = vld [vmem:[%s179] sm:$0xf]
      %v193 = vld [vmem:[%s179 + $0x4] sm:$0xf]
      %v194 = vld [vmem:[%s179 + $0x8] sm:$0xf]
      %v195 = vld [vmem:[%s179 + $0xc] sm:$0xf]
      %v196 = vld [vmem:[%s1] sm:$0xf]
      %v197 = vld [vmem:[%s1 + $0x4] sm:$0xf]
      %v198 = vld [vmem:[%s1 + $0x8] sm:$0xf]
      %v199 = vld [vmem:[%s1 + $0xc] sm:$0xf]
      %v204 = vunpack.c.l.b16 %v192
      %v205 = vunpack.c.l.b16 %v193
      %v206 = vunpack.c.l.b16 %v194
      %v207 = vunpack.c.l.b16 %v195
      %v208 = vpack.c.b16 %v205, %v204
      %v209 = vpack.c.b16 %v207, %v206
      %v214 = vunpack.c.l.b16 %v196
      %v215 = vunpack.c.l.b16 %v197
      %v216 = vunpack.c.l.b16 %v198
      %v217 = vunpack.c.l.b16 %v199
      %v218 = vpack.c.b16 %v215, %v214
      %v219 = vpack.c.b16 %v217, %v216
      %vm222 = vcmask 261120
      %v224 = vsel %vm222, %v208, 0
      %v227 = vsel %vm222, %v209, 0
      %229 = vmatprep.subr.bf16.mxu0 0
      %230 = vmatpush1.bf16.msra.mxu0 %v218
      %231 = vmatprep.subr.bf16.mxu0 0
      %232 = vmatpush1.bf16.msra.mxu0 %v219
      %233 = vmatprep.subr.bf16.mxu0 0
      %234 = vmatpush1.bf16.msra.mxu0 0
      %235 = vmatprep.subr.bf16.mxu0 0
      %236 = vmatpush1.bf16.msra.mxu0 0
      %237 = vmatprep.subr.bf16.mxu0 0
      %238 = vmatpush1.bf16.msra.mxu0 0
      %239 = vmatprep.subr.bf16.mxu0 0
      %240 = vmatpush1.bf16.msra.mxu0 0
      %241 = vmatprep.subr.bf16.mxu0 0
      %242 = vmatpush1.bf16.msra.mxu0 0
      %243 = vmatprep.subr.bf16.mxu0 0
      %244 = vmatpush1.bf16.msra.mxu0 0
      %245 = vmatprep.subr.bf16.mxu0 0
      %246 = vmatpush1.bf16.msra.mxu0 0
      %247 = vmatprep.subr.bf16.mxu0 0
      %248 = vmatpush1.bf16.msra.mxu0 0
      %249 = vmatprep.subr.bf16.mxu0 0
      %250 = vmatpush1.bf16.msra.mxu0 0
      %251 = vmatprep.subr.bf16.mxu0 0
      %252 = vmatpush1.bf16.msra.mxu0 0
      %253 = vmatprep.subr.bf16.mxu0 0
      %254 = vmatpush1.bf16.msra.mxu0 0
      %255 = vmatprep.subr.bf16.mxu0 0
      %256 = vmatpush1.bf16.msra.mxu0 0
      %257 = vmatprep.subr.bf16.mxu0 0
      %258 = vmatpush1.bf16.msra.mxu0 0
      %259 = vmatprep.subr.bf16.mxu0 0
      %260 = vmatpush1.bf16.msra.mxu0 0
      %261 = vmatprep.mubr.bf16.mxu0 0
      %262 = vmatmul.mubr.bf16.gmra.mrb[0].mxu0 %v224
      %v263 = vpop.f32.mrb[0].mxu0
      %v264 = vadd.f32 0.0, %v263
      %v265 = vpop.f32.mrb[0].mxu0
      %v266 = vpop.f32.mrb[0].mxu0
      %v267 = vadd.f32 0.0, %v266
      %v268 = vpop.f32.mrb[0].mxu0
      %269 = vmatprep.mubr.bf16.mxu0 0
      %270 = vmatmul.mubr.bf16.gmra.mrb[0].mxu0 %v227
      %v271 = vpop.f32.mrb[0].mxu0
      %v272 = vadd.f32 0.0, %v271
      %v273 = vpop.f32.mrb[0].mxu0
      %v274 = vpop.f32.mrb[0].mxu0
      %v275 = vadd.f32 0.0, %v274
      %v276 = vpop.f32.mrb[0].mxu0
      %277 = vdwg.mxu0
      %v278 = vld [vmem:[%s184] sm:$0xff]
      %v279 = vunpack.c.0.s8 %v278
      %v280 = vunpack.c.1.s8 %v278
      %v281 = vunpack.c.2.s8 %v278
      %v282 = vunpack.c.3.s8 %v278
      %v283 = vcvt.s32.f32 %v279
      %v284 = vcvt.s32.f32 %v280
      %v285 = vcvt.s32.f32 %v281
      %v286 = vcvt.s32.f32 %v282
      %287 = vadd.xlane.f32.xlu0 %v283
      %v288 = vpop.xlane.xlu0 %287
      %289 = vadd.xlane.f32.xlu0 %v284
      %v290 = vpop.xlane.xlu0 %289
      %291 = vadd.xlane.f32.xlu0 %v285
      %v292 = vpop.xlane.xlu0 %291
      %293 = vadd.xlane.f32.xlu0 %v286
      %v294 = vpop.xlane.xlu0 %293
      %vm295 = vcmp.eq.f32.partialorder %v288, 0.0
      %vm296 = vcmp.eq.f32.partialorder %v290, 0.0
      %vm297 = vcmp.eq.f32.partialorder %v292, 0.0
      %vm298 = vcmp.eq.f32.partialorder %v294, 0.0
      %v299 = vsel %vm295, 96.0, %v288
      %v300 = vsel %vm296, 96.0, %v290
      %v301 = vsel %vm297, 96.0, %v292
      %v302 = vsel %vm298, 96.0, %v294
      %v303 = vrcp.pop %v299
      %v304 = vmul.f32 1.0, %v303
      %v305 = vrcp.pop %v300
      %v306 = vmul.f32 1.0, %v305
      %v307 = vrcp.pop %v301
      %v308 = vmul.f32 1.0, %v307
      %v309 = vrcp.pop %v302
      %v310 = vmul.f32 1.0, %v309
      %v311 = vmul.f32 %v283, %v264
      %v312 = vmul.f32 %v284, %v267
      %v313 = vmul.f32 %v285, %v272
      %v314 = vmul.f32 %v286, %v275
      %v315 = vsel %vm295, 1, 0
      %v316 = vsel %vm296, 1, 0
      %v317 = vsel %vm297, 1, 0
      %v318 = vsel %vm298, 1, 0
      %vm319 = vcmp.eq.s32.totalorder %v315, 1
      %vm320 = vcmp.eq.s32.totalorder %v316, 1
      %vm321 = vcmp.eq.s32.totalorder %v317, 1
      %vm322 = vcmp.eq.s32.totalorder %v318, 1
      %v323 = vsel %vm319, %v264, %v311
      %v324 = vsel %vm320, %v267, %v312
      %v325 = vsel %vm321, %v272, %v313
      %v326 = vsel %vm322, %v275, %v314
      %v327 = vmul.f32 %v323, %v304
      %v328 = vmul.f32 %v324, %v306
      %v329 = vmul.f32 %v325, %v308
      %v330 = vmul.f32 %v326, %v310
      %vm331 = vcmp.gt.f32.partialorder %v327, 0.0
      %vm332 = vcmp.gt.f32.partialorder %v328, 0.0
      %vm333 = vcmp.gt.f32.partialorder %v329, 0.0
      %vm334 = vcmp.gt.f32.partialorder %v330, 0.0
      %v335 = vmul.f32 %v327, 1.442695
      %v336 = vpow.pop %v335
      %v337 = vmul.f32 %v328, 1.442695
      %v338 = vpow.pop %v337
      %v339 = vmul.f32 %v329, 1.442695
      %v340 = vpow.pop %v339
      %v341 = vmul.f32 %v330, 1.442695
      %v342 = vpow.pop %v341
      %v343 = vsub.f32 %v336, 1.0
      %v344 = vsub.f32 %v338, 1.0
      %v345 = vsub.f32 %v340, 1.0
      %v346 = vsub.f32 %v342, 1.0
      %v347 = vsel %vm331, %v327, %v343
      %v348 = vsel %vm332, %v328, %v344
      %v349 = vsel %vm333, %v329, %v345
      %v350 = vsel %vm334, %v330, %v346
      %351 = vst [vmem:[%s189] sm:$0xff] %v347
      %352 = vst [vmem:[%s189 + $0x8] sm:$0xff] %v348
      %353 = vst [vmem:[%s189 + $0x10] sm:$0xff] %v349
      %354 = vst [vmem:[%s189 + $0x18] sm:$0xff] %v350
      %s355 = smul.u32 4, %s14
      %p356 = scmp.lt.s32.totalorder %s355, 7
      %s357 = scalar_select %p356, %s355, 7
      %s358 = smul.addr %s357, 8
      %s359 = scalar_lea.vmem %s3, %s358
      // Predicated region
      $region33: #{gat_forward.1} parent=31 // pred_check
        %p360 = pneg %p105
      $region34: #{gat_forward.1} parent=31 // pred_check_branch
        %362 = sbr.rel (%p360) target = $region36
      $region35: #{gat_forward.1} parent=31 // pred_region
        %s363 = smul.u32 4, %s14
      $region36: #{gat_forward.1} parent=31 // pred_fallthru
        _
    $region32: #{gat_forward.1} parent=5 // pred_fallthru
      _
    %p364 = scmp.le.s32.totalorder 2, %s9
    // Predicated region
    $region37: #{gat_forward.1} parent=5 // pred_check
      %p365 = pneg %p364
    $region38: #{gat_forward.1} parent=5 // pred_check_branch
      %367 = sbr.rel (%p365) target = $region40
    $region39: #{gat_forward.1} parent=5 // pred_region
      %s368 = ssub.s32 %s9, 2
      // Predicated region
      $region41: #{gat_forward.1} parent=39 // pred_check
        %p369 = pneg %p111
      $region42: #{gat_forward.1} parent=39 // pred_check_branch
        %371 = sbr.rel (%p369) target = $region44
      $region43: #{gat_forward.1} parent=39 // pred_region
        %s372 = smul.u32 4, %s15
        %p373 = scmp.lt.s32.totalorder %s372, 7
        %s374 = scalar_select %p373, %s372, 7
        %s375 = smul.addr %s374, 8
        %s376 = scalar_lea.vmem %s3, %s375
      $region44: #{gat_forward.1} parent=39 // pred_fallthru
        _
    $region40: #{gat_forward.1} parent=5 // pred_fallthru
      _
  $region6: #{gat_forward.1} parent=0 // loop_footer
    %s13 = sadd.s32 1, %s9
  $region7: #{gat_forward.1} parent=0 // loop_footer_branch
    %8 = sbr.rel target = $region3
  $region8: #{gat_forward.1} parent=0 // loop_exit
    _

</llo_original>
